<compile_context>
chip_gen: v5e
topology: v5e:2x2
jax: 0.10.0
libtpu: 0.0.40
codegen_flags: <defaults>
</compile_context>

<pallas_src>
import functools

import jax
import jax.numpy as jnp
import numpy as np
from jax.experimental import pallas as pl
from jax.experimental.pallas import tpu as pltpu


def _round_up(x, m):
    return ((x + m - 1) // m) * m


# lane assignment of the per-(batch, query-tile) partial sums in the (8, 128) block
_LANE_CE_NUM = 0    # sum w[y] * (-log_softmax(x)[y])
_LANE_CARD = 1      # # predicted non-empty boxes in this tile
_LANE_CORRECT = 2   # # matched rows with argmax == target
_LANE_L1 = 3        # sum |src - tgt| over matched boxes of batch b (tile 0 only)
_LANE_GIOU = 4      # sum (1 - giou) over matched boxes of batch b (tile 0 only)
_EPS = 1e-7


def _fused_kernel(logits_ref, onehot_ref, sbox_ref, tbox_ref, out_ref, *,
                  eos_coef, Q, T, TQ, T_sub, T_pad):
    """One (batch b, query-tile qt) grid point -> one (1,1,8,128) partial block."""
    C1 = logits_ref.shape[-1]
    qt = pl.program_id(1)
    is_first = jnp.where(qt == 0, jnp.float32(1.0), jnp.float32(0.0))

    # ---- classification side (queries on sublanes, classes on lanes) ---------
    x = logits_ref[...].astype(jnp.float32)               # (TQ, C1) upcast in-kernel
    row = jax.lax.broadcasted_iota(jnp.int32, (TQ, 1), 0)
    gq = qt * TQ + row                                     # global query index
    valid = (gq < Q).astype(jnp.float32)                   # mask padded query rows
    noobj = jnp.logical_and(gq >= T, gq < Q).astype(jnp.float32)

    cls_iota = jax.lax.broadcasted_iota(jnp.int32, (TQ, C1), 1)
    row_max = jnp.max(x, axis=-1, keepdims=True)
    lse = row_max + jnp.log(jnp.sum(jnp.exp(x - row_max), axis=-1, keepdims=True))

    # no-object rows (identity matcher: queries T..Q-1): target = C1-1, weight eos_coef
    x_eos = jnp.sum(jnp.where(cls_iota == C1 - 1, x, 0.0), axis=-1, keepdims=True)
    ce_noobj = jnp.float32(eos_coef) * jnp.sum(noobj * (lse - x_eos))

    # matched rows (queries 0..T-1, always inside the first tile): weight 1
    oh = onehot_ref[0]                                     # (T_sub, C1) f32, pad rows = 0
    x_m = x[0:T_sub, :]
    lse_m = lse[0:T_sub, :]
    oh_rowsum = jnp.sum(oh, axis=-1, keepdims=True)        # 1 for matched, 0 for pad
    ce_matched = jnp.sum(lse_m * oh_rowsum) - jnp.sum(x_m * oh)
    ce_num = ce_matched * is_first + ce_noobj

    # first-occurrence argmax (torch semantics): cardinality + class error
    arg_first = jnp.min(jnp.where(x == row_max, cls_iota, C1), axis=-1, keepdims=True)
    is_obj = (arg_first != (C1 - 1)).astype(jnp.float32) * valid
    card_partial = jnp.sum(is_obj)
    correct_partial = is_first * jnp.sum(
        oh * (cls_iota[0:T_sub, :] == arg_first[0:T_sub, :]).astype(jnp.float32))

    # ---- box losses (lane-dense (8, T_pad); cheap, masked to the first tile) --
    s = sbox_ref[0].astype(jnp.float32)                    # rows: cx, cy, w, h, pad x4
    g = tbox_ref[0].astype(jnp.float32)
    col = jax.lax.broadcasted_iota(jnp.int32, (1, T_pad), 1)
    cmask = (col < T).astype(jnp.float32)                  # mask padded box columns

    l1_sum = jnp.sum(jnp.sum(jnp.abs(s - g), axis=0, keepdims=True) * cmask)

    scx, scy, sw, sh = s[0:1], s[1:2], s[2:3], s[3:4]
    gcx, gcy, gw, gh = g[0:1], g[1:2], g[2:3], g[3:4]
    sx1, sy1 = scx - 0.5 * sw, scy - 0.5 * sh
    sx2, sy2 = scx + 0.5 * sw, scy + 0.5 * sh
    gx1, gy1 = gcx - 0.5 * gw, gcy - 0.5 * gh
    gx2, gy2 = gcx + 0.5 * gw, gcy + 0.5 * gh
    area_s = (sx2 - sx1) * (sy2 - sy1)
    area_g = (gx2 - gx1) * (gy2 - gy1)
    iw = jnp.maximum(jnp.minimum(sx2, gx2) - jnp.maximum(sx1, gx1), 0.0)
    ih = jnp.maximum(jnp.minimum(sy2, gy2) - jnp.maximum(sy1, gy1), 0.0)
    inter = iw * ih
    union = area_s + area_g - inter
    iou = inter / jnp.maximum(union, _EPS)   # eps guards degenerate boxes (ref would NaN)
    cw = jnp.maximum(jnp.maximum(sx2, gx2) - jnp.minimum(sx1, gx1), 0.0)
    ch = jnp.maximum(jnp.maximum(sy2, gy2) - jnp.minimum(sy1, gy1), 0.0)
    carea = jnp.maximum(cw * ch, _EPS)
    giou = iou - (carea - union) / carea
    giou_sum = jnp.sum((1.0 - giou) * cmask)

    # ---- full-tile (lane-dense, unmasked) store of this grid point's partials -
    lane = jax.lax.broadcasted_iota(jnp.int32, (8, 128), 1)
    tile = (jnp.where(lane == _LANE_CE_NUM, ce_num, 0.0)
            + jnp.where(lane == _LANE_CARD, card_partial, 0.0)
            + jnp.where(lane == _LANE_CORRECT, correct_partial, 0.0)
            + jnp.where(lane == _LANE_L1, l1_sum * is_first, 0.0)
            + jnp.where(lane == _LANE_GIOU, giou_sum * is_first, 0.0))
    out_ref[...] = tile[None, None]


def _choose_query_tile(Q, C1, tile_queries):
    """Pick the largest query tile that keeps the double-buffered f32 logits tile
    comfortably inside the default scoped VMEM on every TPU generation."""
    if tile_queries is None:
        budget = 8 * 1024 * 1024                      # bytes for 2 x (TQ, C1) f32 buffers
        cap = budget // (2 * 4 * max(C1, 1))
        cap = max(256, min(2048, (cap // 128) * 128))
    else:
        cap = max(128, (int(tile_queries) // 128) * 128)
    if Q <= cap:
        TQ = _round_up(Q, 8)
    else:
        TQ = cap
    Q_pad = _round_up(Q, TQ)
    return TQ, Q_pad, Q_pad // TQ


def set_criterion_forward(outputs, targets, num_classes, eos_coef, tile_queries=None):
    pred_logits = outputs["pred_logits"]             # [B, Q, C+1]
    pred_boxes = outputs["pred_boxes"]               # [B, Q, 4]
    labels = targets["labels"]                       # [B, T] int
    boxes = targets["boxes"]                         # [B, T, 4]

    B, Q, C1 = pred_logits.shape
    T = labels.shape[1]
    assert C1 == num_classes + 1 and 1 <= T <= Q

    # TODO(synk): Hungarian matcher stand-in: identity matching target j <-> query j
    num_boxes = max(B * T, 1)

    TQ, Q_pad, NQT = _choose_query_tile(Q, C1, tile_queries)
    T_sub = _round_up(T, 8)
    T_pad = _round_up(T, 128)
    assert T_sub <= TQ, "matched targets must fit inside the first query tile"

    # logits flattened to lane-friendly 2D; bf16 stays bf16 (kernel upcasts)
    logits = pred_logits
    if Q_pad != Q:
        logits = jnp.pad(logits, ((0, 0), (0, Q_pad - Q), (0, 0)))
    logits2d = logits.reshape(B * Q_pad, C1)

    # matched labels as a tiny lane-dense per-batch one-hot (pad rows are zero);
    # replaces the old (TQ,1) int32 stream (128x VMEM bloat + sub-lane-strided DMA).
    onehot = jax.nn.one_hot(labels.astype(jnp.int32), C1, dtype=jnp.float32)   # (B,T,C1)
    onehot = jnp.pad(onehot, ((0, 0), (0, T_sub - T), (0, 0)))

    # matched boxes in lane-dense [8, T_pad] layout (rows: cx, cy, w, h, pad x4)
    def to_lane_dense(b4):
        bt = jnp.transpose(b4, (0, 2, 1))            # (B, 4, T)
        return jnp.pad(bt, ((0, 0), (0, 4), (0, T_pad - T)))

    src_t = to_lane_dense(pred_boxes[:, :T, :])
    tgt_t = to_lane_dense(boxes)

    kernel = functools.partial(
        _fused_kernel, eos_coef=float(eos_coef),
        Q=Q, T=T, TQ=TQ, T_sub=T_sub, T_pad=T_pad)

    partials = pl.pallas_call(
        kernel,
        out_shape=jax.ShapeDtypeStruct((B, NQT, 8, 128), jnp.float32),
        grid=(B, NQT),
        in_specs=[
            pl.BlockSpec((TQ, C1), lambda b, qt: (b * NQT + qt, 0)),
            pl.BlockSpec((1, T_sub, C1), lambda b, qt: (b, 0, 0)),
            pl.BlockSpec((1, 8, T_pad), lambda b, qt: (b, 0, 0)),
            pl.BlockSpec((1, 8, T_pad), lambda b, qt: (b, 0, 0)),
        ],
        out_specs=pl.BlockSpec((1, 1, 8, 128), lambda b, qt: (b, qt, 0, 0)),
        compiler_params=pltpu.CompilerParams(
            dimension_semantics=("parallel", "parallel")),
    )(logits2d, onehot, src_t, tgt_t)

    # tiny epilogue: reduce the per-(b, qt) partial blocks to scalars
    p = partials[:, :, 0, :]                          # (B, NQT, 128)
    ce_num = jnp.sum(p[..., _LANE_CE_NUM])
    # identity matching + labels < num_classes => CE weight sum is a constant
    ce_den = float(B) * (float(T) + float(eos_coef) * float(Q - T))
    loss_ce = ce_num / ce_den

    card_pred = jnp.sum(p[..., _LANE_CARD], axis=1)   # (B,)
    card_err = jnp.mean(jnp.abs(card_pred - float(T)))
    class_error = 100.0 - 100.0 * jnp.sum(p[..., _LANE_CORRECT]) / float(B * T)
    loss_bbox = jnp.sum(p[..., _LANE_L1]) / num_boxes
    loss_giou = jnp.sum(p[..., _LANE_GIOU]) / num_boxes

    return {
        "loss_ce": loss_ce,
        "class_error": class_error,
        "cardinality_error": card_err,
        "loss_bbox": loss_bbox,
        "loss_giou": loss_giou,
    }


# ----------------------------------------------------------------------------
# Pure-JAX reference (for correctness check)
# ----------------------------------------------------------------------------
def _reference(outputs, targets, num_classes, eos_coef):
    pred_logits = outputs["pred_logits"]
    pred_boxes = outputs["pred_boxes"]
    labels = targets["labels"]
    boxes = targets["boxes"]
    B, Q, C1 = pred_logits.shape
    T = labels.shape[1]
    num_boxes = max(B * T, 1)

    empty_weight = jnp.ones((C1,), jnp.float32).at[-1].set(eos_coef)
    target_classes = jnp.full((B, Q), num_classes, dtype=jnp.int32).at[:, :T].set(labels)

    logp = jax.nn.log_softmax(pred_logits.astype(jnp.float32), axis=-1)
    nll = -jnp.take_along_axis(logp, target_classes[..., None], axis=-1)[..., 0]
    w = empty_weight[target_classes]
    loss_ce = jnp.sum(w * nll) / jnp.sum(w)

    matched_logits = pred_logits[:, :T, :].reshape(B * T, C1)
    tgt_o = labels.reshape(-1)
    acc = jnp.mean((jnp.argmax(matched_logits, -1) == tgt_o).astype(jnp.float32)) * 100.0
    class_error = 100.0 - acc

    card_pred = jnp.sum(jnp.argmax(pred_logits, -1) != C1 - 1, axis=1).astype(jnp.float32)
    card_err = jnp.mean(jnp.abs(card_pred - float(T)))

    src = pred_boxes[:, :T, :].reshape(B * T, 4).astype(jnp.float32)
    tgt = boxes.reshape(B * T, 4).astype(jnp.float32)
    loss_bbox = jnp.sum(jnp.abs(src - tgt)) / num_boxes

    def xyxy(b):
        return jnp.concatenate([b[:, :2] - 0.5 * b[:, 2:], b[:, :2] + 0.5 * b[:, 2:]], -1)

    s, t = xyxy(src), xyxy(tgt)
    area_s = (s[:, 2] - s[:, 0]) * (s[:, 3] - s[:, 1])
    area_t = (t[:, 2] - t[:, 0]) * (t[:, 3] - t[:, 1])
    lt = jnp.maximum(s[:, :2], t[:, :2])
    rb = jnp.minimum(s[:, 2:], t[:, 2:])
    wh = jnp.maximum(rb - lt, 0.0)
    inter = wh[:, 0] * wh[:, 1]
    union = area_s + area_t - inter
    iou = inter / union
    clt = jnp.minimum(s[:, :2], t[:, :2])
    crb = jnp.maximum(s[:, 2:], t[:, 2:])
    cwh = jnp.maximum(crb - clt, 0.0)
    carea = cwh[:, 0] * cwh[:, 1]
    giou = iou - (carea - union) / carea
    loss_giou = jnp.sum(1.0 - giou) / num_boxes

    return {"loss_ce": loss_ce, "class_error": class_error,
            "cardinality_error": card_err,
            "loss_bbox": loss_bbox, "loss_giou": loss_giou}


def _make_inputs(key, B, Q, num_classes, T, logits_dtype=jnp.float32):
    C1 = num_classes + 1
    k1, k2, k3, k4 = jax.random.split(key, 4)
    pred_logits = jax.random.normal(k1, (B, Q, C1), jnp.float32).astype(logits_dtype)
    pred_boxes = jax.nn.sigmoid(jax.random.normal(k2, (B, Q, 4), jnp.float32))
    tgt_labels = jax.random.randint(k3, (B, T), 0, num_classes, jnp.int32)
    cxy = jax.random.uniform(k4, (B, T, 2), jnp.float32, 0.3, 0.7)
    wh = jax.random.uniform(jax.random.fold_in(k4, 1), (B, T, 2), jnp.float32, 0.05, 0.3)
    tgt_boxes = jnp.concatenate([cxy, wh], axis=-1)
    outputs = {"pred_logits": pred_logits, "pred_boxes": pred_boxes}
    targets = {"labels": tgt_labels, "boxes": tgt_boxes}
    return outputs, targets


if __name__ == "__main__":
    key = jax.random.PRNGKey(0)
    eos_coef = 0.1

    # (B, Q, num_classes, T, logits_dtype, tile_queries)
    configs = [
        (2, 8, 4, 3, jnp.float32, None),        # tiny base config, single tile
        (2, 600, 10, 5, jnp.float32, 256),      # forces NQT=3 (multi-tile path)
        (2, 100, 91, 6, jnp.bfloat16, None),    # DETR-like class count, bf16 logits
    ]
    for i, (B, Q, num_classes, T, dt, tq) in enumerate(configs):
        outputs, targets = _make_inputs(jax.random.fold_in(key, i), B, Q, num_classes, T, dt)
        losses = set_criterion_forward(outputs, targets, num_classes, eos_coef,
                                       tile_queries=tq)
        losses = jax.tree_util.tree_map(jax.block_until_ready, losses)

        ref = _reference(outputs, targets, num_classes, eos_coef)
        for k in ("loss_ce", "class_error", "cardinality_error", "loss_bbox", "loss_giou"):
            np.testing.assert_allclose(np.asarray(losses[k]), np.asarray(ref[k]),
                                       rtol=2e-3, atol=2e-4)

    print("KERNEL_OK")
</pallas_src>

<mosaic_0001>
module attributes {stable_mosaic.version = 11 : i64} {
  func.func @_fused_kernel(%arg0: i32, %arg1: i32, %arg2: memref<8x5xf32, #tpu.memory_space<vmem>>, %arg3: memref<1x8x5xf32, #tpu.memory_space<vmem>>, %arg4: memref<1x8x128xf32, #tpu.memory_space<vmem>>, %arg5: memref<1x8x128xf32, #tpu.memory_space<vmem>>, %arg6: memref<1x1x8x128xf32, #tpu.memory_space<vmem>>) attributes {dimension_semantics = [#tpu.dimension_semantics<parallel>, #tpu.dimension_semantics<parallel>], iteration_bounds = array<i64: 2, 1>, scalar_prefetch = 0 : i64, scratch_operands = 0 : i64, tpu.core_type = #tpu.core_type<tc>, window_params = [{transform_indices = @transform_0, window_bounds = array<i64: 8, 5>}, {transform_indices = @transform_1, window_bounds = array<i64: 1, 8, 5>}, {transform_indices = @transform_2, window_bounds = array<i64: 1, 8, 128>}, {transform_indices = @transform_3, window_bounds = array<i64: 1, 8, 128>}, {transform_indices = @transform_4, window_bounds = array<i64: 1, 1, 8, 128>}]} {
    %c0_i32 = arith.constant 0 : i32
    %0 = arith.cmpi eq, %arg1, %c0_i32 : i32
    %cst = arith.constant 1.000000e+00 : f32
    %cst_0 = arith.constant 0.000000e+00 : f32
    %1 = arith.select %0, %cst, %cst_0 : f32
    %c0 = arith.constant 0 : index
    %c0_1 = arith.constant 0 : index
    %2 = vector.load %arg2[%c0, %c0_1] : memref<8x5xf32, #tpu.memory_space<vmem>>, vector<8x5xf32>
    %3 = tpu.iota {dimensions = array<i32: 0>} : vector<8x1xi32>
    %c8_i32 = arith.constant 8 : i32
    %4 = arith.muli %arg1, %c8_i32 : i32
    %5 = vector.broadcast %4 : i32 to vector<8x1xi32>
    %6 = arith.addi %5, %3 : vector<8x1xi32>
    %c8_i32_2 = arith.constant 8 : i32
    %7 = vector.broadcast %c8_i32_2 : i32 to vector<8x1xi32>
    %8 = arith.cmpi slt, %6, %7 : vector<8x1xi32>
    %9 = arith.extui %8 : vector<8x1xi1> to vector<8x1xi32>
    %10 = arith.sitofp %9 : vector<8x1xi32> to vector<8x1xf32>
    %c3_i32 = arith.constant 3 : i32
    %11 = vector.broadcast %c3_i32 : i32 to vector<8x1xi32>
    %12 = arith.cmpi sge, %6, %11 : vector<8x1xi32>
    %c8_i32_3 = arith.constant 8 : i32
    %13 = vector.broadcast %c8_i32_3 : i32 to vector<8x1xi32>
    %14 = arith.cmpi slt, %6, %13 : vector<8x1xi32>
    %15 = arith.andi %12, %14 : vector<8x1xi1>
    %16 = arith.extui %15 : vector<8x1xi1> to vector<8x1xi32>
    %17 = arith.sitofp %16 : vector<8x1xi32> to vector<8x1xf32>
    %18 = tpu.iota {dimensions = array<i32: 1>} : vector<8x5xi32>
    %cst_4 = arith.constant dense<0xFF800000> : vector<8xf32>
    %19 = vector.multi_reduction <maximumf>, %2, %cst_4 [1] : vector<8x5xf32> to vector<8xf32>
    %20 = vector.shape_cast %19 : vector<8xf32> to vector<8x1xf32>
    %21 = vector.broadcast %20 : vector<8x1xf32> to vector<8x5xf32>
    %22 = arith.subf %2, %21 : vector<8x5xf32>
    %23 = math.exp %22 : vector<8x5xf32>
    %cst_5 = arith.constant dense<0.000000e+00> : vector<8xf32>
    %24 = vector.multi_reduction <add>, %23, %cst_5 [1] : vector<8x5xf32> to vector<8xf32>
    %25 = vector.shape_cast %24 : vector<8xf32> to vector<8x1xf32>
    %26 = math.log %25 : vector<8x1xf32>
    %27 = arith.addf %20, %26 : vector<8x1xf32>
    %c4_i32 = arith.constant 4 : i32
    %28 = vector.broadcast %c4_i32 : i32 to vector<8x5xi32>
    %29 = arith.cmpi eq, %18, %28 : vector<8x5xi32>
    %cst_6 = arith.constant 0.000000e+00 : f32
    %30 = vector.broadcast %cst_6 : f32 to vector<8x5xf32>
    %31 = arith.select %29, %2, %30 : vector<8x5xi1>, vector<8x5xf32>
    %cst_7 = arith.constant dense<0.000000e+00> : vector<8xf32>
    %32 = vector.multi_reduction <add>, %31, %cst_7 [1] : vector<8x5xf32> to vector<8xf32>
    %33 = vector.shape_cast %32 : vector<8xf32> to vector<8x1xf32>
    %34 = arith.subf %27, %33 : vector<8x1xf32>
    %35 = arith.mulf %17, %34 : vector<8x1xf32>
    %36 = vector.shape_cast %35 : vector<8x1xf32> to vector<1x8x1xf32>
    %cst_8 = arith.constant dense<0.000000e+00> : vector<1xf32>
    %37 = vector.multi_reduction <add>, %36, %cst_8 [1, 2] : vector<1x8x1xf32> to vector<1xf32>
    %38 = vector.shape_cast %37 : vector<1xf32> to vector<1x1x1xf32>
    %39 = vector.extract %38[0, 0, 0] : f32 from vector<1x1x1xf32>
    %cst_9 = arith.constant 1.000000e-01 : f32
    %40 = arith.mulf %cst_9, %39 : f32
    %c0_10 = arith.constant 0 : index
    %c0_11 = arith.constant 0 : index
    %c0_12 = arith.constant 0 : index
    %41 = vector.load %arg3[%c0_10, %c0_11, %c0_12] : memref<1x8x5xf32, #tpu.memory_space<vmem>>, vector<1x8x5xf32>
    %42 = vector.shape_cast %41 : vector<1x8x5xf32> to vector<8x5xf32>
    %cst_13 = arith.constant dense<0.000000e+00> : vector<8xf32>
    %43 = vector.multi_reduction <add>, %42, %cst_13 [1] : vector<8x5xf32> to vector<8xf32>
    %44 = vector.shape_cast %43 : vector<8xf32> to vector<8x1xf32>
    %45 = arith.mulf %27, %44 : vector<8x1xf32>
    %46 = vector.shape_cast %45 : vector<8x1xf32> to vector<1x8x1xf32>
    %cst_14 = arith.constant dense<0.000000e+00> : vector<1xf32>
    %47 = vector.multi_reduction <add>, %46, %cst_14 [1, 2] : vector<1x8x1xf32> to vector<1xf32>
    %48 = vector.shape_cast %47 : vector<1xf32> to vector<1x1x1xf32>
    %49 = vector.extract %48[0, 0, 0] : f32 from vector<1x1x1xf32>
    %50 = arith.mulf %2, %42 : vector<8x5xf32>
    %51 = vector.shape_cast %50 : vector<8x5xf32> to vector<1x8x5xf32>
    %cst_15 = arith.constant dense<0.000000e+00> : vector<1xf32>
    %52 = vector.multi_reduction <add>, %51, %cst_15 [1, 2] : vector<1x8x5xf32> to vector<1xf32>
    %53 = vector.shape_cast %52 : vector<1xf32> to vector<1x1x1xf32>
    %54 = vector.extract %53[0, 0, 0] : f32 from vector<1x1x1xf32>
    %55 = arith.subf %49, %54 : f32
    %56 = arith.mulf %55, %1 : f32
    %57 = arith.addf %56, %40 : f32
    %58 = vector.broadcast %20 : vector<8x1xf32> to vector<8x5xf32>
    %59 = arith.cmpf oeq, %2, %58 : vector<8x5xf32>
    %c5_i32 = arith.constant 5 : i32
    %60 = vector.broadcast %c5_i32 : i32 to vector<8x5xi32>
    %61 = arith.select %59, %18, %60 : vector<8x5xi1>, vector<8x5xi32>
    %cst_16 = arith.constant dense<2147483647> : vector<8xi32>
    %62 = vector.multi_reduction <minsi>, %61, %cst_16 [1] : vector<8x5xi32> to vector<8xi32>
    %63 = vector.shape_cast %62 : vector<8xi32> to vector<8x1xi32>
    %c4_i32_17 = arith.constant 4 : i32
    %64 = vector.broadcast %c4_i32_17 : i32 to vector<8x1xi32>
    %65 = arith.cmpi ne, %63, %64 : vector<8x1xi32>
    %66 = arith.extui %65 : vector<8x1xi1> to vector<8x1xi32>
    %67 = arith.sitofp %66 : vector<8x1xi32> to vector<8x1xf32>
    %68 = arith.mulf %67, %10 : vector<8x1xf32>
    %69 = vector.shape_cast %68 : vector<8x1xf32> to vector<1x8x1xf32>
    %cst_18 = arith.constant dense<0.000000e+00> : vector<1xf32>
    %70 = vector.multi_reduction <add>, %69, %cst_18 [1, 2] : vector<1x8x1xf32> to vector<1xf32>
    %71 = vector.shape_cast %70 : vector<1xf32> to vector<1x1x1xf32>
    %72 = vector.extract %71[0, 0, 0] : f32 from vector<1x1x1xf32>
    %73 = vector.broadcast %63 : vector<8x1xi32> to vector<8x5xi32>
    %74 = arith.cmpi eq, %18, %73 : vector<8x5xi32>
    %75 = arith.extui %74 : vector<8x5xi1> to vector<8x5xi32>
    %76 = arith.sitofp %75 : vector<8x5xi32> to vector<8x5xf32>
    %77 = arith.mulf %42, %76 : vector<8x5xf32>
    %78 = vector.shape_cast %77 : vector<8x5xf32> to vector<1x8x5xf32>
    %cst_19 = arith.constant dense<0.000000e+00> : vector<1xf32>
    %79 = vector.multi_reduction <add>, %78, %cst_19 [1, 2] : vector<1x8x5xf32> to vector<1xf32>
    %80 = vector.shape_cast %79 : vector<1xf32> to vector<1x1x1xf32>
    %81 = vector.extract %80[0, 0, 0] : f32 from vector<1x1x1xf32>
    %82 = arith.mulf %1, %81 : f32
    %c0_20 = arith.constant 0 : index
    %c0_21 = arith.constant 0 : index
    %c0_22 = arith.constant 0 : index
    %83 = vector.load %arg4[%c0_20, %c0_21, %c0_22] : memref<1x8x128xf32, #tpu.memory_space<vmem>>, vector<1x8x128xf32>
    %84 = vector.shape_cast %83 : vector<1x8x128xf32> to vector<8x128xf32>
    %c0_23 = arith.constant 0 : index
    %c0_24 = arith.constant 0 : index
    %c0_25 = arith.constant 0 : index
    %85 = vector.load %arg5[%c0_23, %c0_24, %c0_25] : memref<1x8x128xf32, #tpu.memory_space<vmem>>, vector<1x8x128xf32>
    %86 = vector.shape_cast %85 : vector<1x8x128xf32> to vector<8x128xf32>
    %87 = tpu.iota {dimensions = array<i32: 1>} : vector<1x128xi32>
    %c3_i32_26 = arith.constant 3 : i32
    %88 = vector.broadcast %c3_i32_26 : i32 to vector<1x128xi32>
    %89 = arith.cmpi slt, %87, %88 : vector<1x128xi32>
    %90 = arith.extui %89 : vector<1x128xi1> to vector<1x128xi32>
    %91 = arith.sitofp %90 : vector<1x128xi32> to vector<1x128xf32>
    %92 = arith.subf %84, %86 : vector<8x128xf32>
    %93 = math.absf %92 : vector<8x128xf32>
    %cst_27 = arith.constant dense<0.000000e+00> : vector<128xf32>
    %94 = vector.multi_reduction <add>, %93, %cst_27 [0] : vector<8x128xf32> to vector<128xf32>
    %95 = vector.shape_cast %94 : vector<128xf32> to vector<1x128xf32>
    %96 = arith.mulf %95, %91 : vector<1x128xf32>
    %97 = vector.shape_cast %96 : vector<1x128xf32> to vector<1x1x128xf32>
    %cst_28 = arith.constant dense<0.000000e+00> : vector<1xf32>
    %98 = vector.multi_reduction <add>, %97, %cst_28 [1, 2] : vector<1x1x128xf32> to vector<1xf32>
    %99 = vector.shape_cast %98 : vector<1xf32> to vector<1x1x1xf32>
    %100 = vector.extract %99[0, 0, 0] : f32 from vector<1x1x1xf32>
    %101 = vector.extract_strided_slice %84 {offsets = [0, 0], sizes = [1, 128], strides = [1, 1]} : vector<8x128xf32> to vector<1x128xf32>
    %102 = vector.extract_strided_slice %84 {offsets = [1, 0], sizes = [1, 128], strides = [1, 1]} : vector<8x128xf32> to vector<1x128xf32>
    %103 = vector.extract_strided_slice %84 {offsets = [2, 0], sizes = [1, 128], strides = [1, 1]} : vector<8x128xf32> to vector<1x128xf32>
    %104 = vector.extract_strided_slice %84 {offsets = [3, 0], sizes = [1, 128], strides = [1, 1]} : vector<8x128xf32> to vector<1x128xf32>
    %105 = vector.extract_strided_slice %86 {offsets = [0, 0], sizes = [1, 128], strides = [1, 1]} : vector<8x128xf32> to vector<1x128xf32>
    %106 = vector.extract_strided_slice %86 {offsets = [1, 0], sizes = [1, 128], strides = [1, 1]} : vector<8x128xf32> to vector<1x128xf32>
    %107 = vector.extract_strided_slice %86 {offsets = [2, 0], sizes = [1, 128], strides = [1, 1]} : vector<8x128xf32> to vector<1x128xf32>
    %108 = vector.extract_strided_slice %86 {offsets = [3, 0], sizes = [1, 128], strides = [1, 1]} : vector<8x128xf32> to vector<1x128xf32>
    %cst_29 = arith.constant 5.000000e-01 : f32
    %109 = vector.broadcast %cst_29 : f32 to vector<1x128xf32>
    %110 = arith.mulf %109, %103 : vector<1x128xf32>
    %111 = arith.subf %101, %110 : vector<1x128xf32>
    %cst_30 = arith.constant 5.000000e-01 : f32
    %112 = vector.broadcast %cst_30 : f32 to vector<1x128xf32>
    %113 = arith.mulf %112, %104 : vector<1x128xf32>
    %114 = arith.subf %102, %113 : vector<1x128xf32>
    %cst_31 = arith.constant 5.000000e-01 : f32
    %115 = vector.broadcast %cst_31 : f32 to vector<1x128xf32>
    %116 = arith.mulf %115, %103 : vector<1x128xf32>
    %117 = arith.addf %101, %116 : vector<1x128xf32>
    %cst_32 = arith.constant 5.000000e-01 : f32
    %118 = vector.broadcast %cst_32 : f32 to vector<1x128xf32>
    %119 = arith.mulf %118, %104 : vector<1x128xf32>
    %120 = arith.addf %102, %119 : vector<1x128xf32>
    %cst_33 = arith.constant 5.000000e-01 : f32
    %121 = vector.broadcast %cst_33 : f32 to vector<1x128xf32>
    %122 = arith.mulf %121, %107 : vector<1x128xf32>
    %123 = arith.subf %105, %122 : vector<1x128xf32>
    %cst_34 = arith.constant 5.000000e-01 : f32
    %124 = vector.broadcast %cst_34 : f32 to vector<1x128xf32>
    %125 = arith.mulf %124, %108 : vector<1x128xf32>
    %126 = arith.subf %106, %125 : vector<1x128xf32>
    %cst_35 = arith.constant 5.000000e-01 : f32
    %127 = vector.broadcast %cst_35 : f32 to vector<1x128xf32>
    %128 = arith.mulf %127, %107 : vector<1x128xf32>
    %129 = arith.addf %105, %128 : vector<1x128xf32>
    %cst_36 = arith.constant 5.000000e-01 : f32
    %130 = vector.broadcast %cst_36 : f32 to vector<1x128xf32>
    %131 = arith.mulf %130, %108 : vector<1x128xf32>
    %132 = arith.addf %106, %131 : vector<1x128xf32>
    %133 = arith.subf %117, %111 : vector<1x128xf32>
    %134 = arith.subf %120, %114 : vector<1x128xf32>
    %135 = arith.mulf %133, %134 : vector<1x128xf32>
    %136 = arith.subf %129, %123 : vector<1x128xf32>
    %137 = arith.subf %132, %126 : vector<1x128xf32>
    %138 = arith.mulf %136, %137 : vector<1x128xf32>
    %139 = arith.minimumf %117, %129 : vector<1x128xf32>
    %140 = arith.maximumf %111, %123 : vector<1x128xf32>
    %141 = arith.subf %139, %140 : vector<1x128xf32>
    %cst_37 = arith.constant 0.000000e+00 : f32
    %142 = vector.broadcast %cst_37 : f32 to vector<1x128xf32>
    %143 = arith.maximumf %141, %142 : vector<1x128xf32>
    %144 = arith.minimumf %120, %132 : vector<1x128xf32>
    %145 = arith.maximumf %114, %126 : vector<1x128xf32>
    %146 = arith.subf %144, %145 : vector<1x128xf32>
    %cst_38 = arith.constant 0.000000e+00 : f32
    %147 = vector.broadcast %cst_38 : f32 to vector<1x128xf32>
    %148 = arith.maximumf %146, %147 : vector<1x128xf32>
    %149 = arith.mulf %143, %148 : vector<1x128xf32>
    %150 = arith.addf %135, %138 : vector<1x128xf32>
    %151 = arith.subf %150, %149 : vector<1x128xf32>
    %cst_39 = arith.constant 1.000000e-07 : f32
    %152 = vector.broadcast %cst_39 : f32 to vector<1x128xf32>
    %153 = arith.maximumf %151, %152 : vector<1x128xf32>
    %154 = arith.divf %149, %153 : vector<1x128xf32>
    %155 = arith.maximumf %117, %129 : vector<1x128xf32>
    %156 = arith.minimumf %111, %123 : vector<1x128xf32>
    %157 = arith.subf %155, %156 : vector<1x128xf32>
    %cst_40 = arith.constant 0.000000e+00 : f32
    %158 = vector.broadcast %cst_40 : f32 to vector<1x128xf32>
    %159 = arith.maximumf %157, %158 : vector<1x128xf32>
    %160 = arith.maximumf %120, %132 : vector<1x128xf32>
    %161 = arith.minimumf %114, %126 : vector<1x128xf32>
    %162 = arith.subf %160, %161 : vector<1x128xf32>
    %cst_41 = arith.constant 0.000000e+00 : f32
    %163 = vector.broadcast %cst_41 : f32 to vector<1x128xf32>
    %164 = arith.maximumf %162, %163 : vector<1x128xf32>
    %165 = arith.mulf %159, %164 : vector<1x128xf32>
    %cst_42 = arith.constant 1.000000e-07 : f32
    %166 = vector.broadcast %cst_42 : f32 to vector<1x128xf32>
    %167 = arith.maximumf %165, %166 : vector<1x128xf32>
    %168 = arith.subf %167, %151 : vector<1x128xf32>
    %169 = arith.divf %168, %167 : vector<1x128xf32>
    %170 = arith.subf %154, %169 : vector<1x128xf32>
    %cst_43 = arith.constant 1.000000e+00 : f32
    %171 = vector.broadcast %cst_43 : f32 to vector<1x128xf32>
    %172 = arith.subf %171, %170 : vector<1x128xf32>
    %173 = arith.mulf %172, %91 : vector<1x128xf32>
    %174 = vector.shape_cast %173 : vector<1x128xf32> to vector<1x1x128xf32>
    %cst_44 = arith.constant dense<0.000000e+00> : vector<1xf32>
    %175 = vector.multi_reduction <add>, %174, %cst_44 [1, 2] : vector<1x1x128xf32> to vector<1xf32>
    %176 = vector.shape_cast %175 : vector<1xf32> to vector<1x1x1xf32>
    %177 = vector.extract %176[0, 0, 0] : f32 from vector<1x1x1xf32>
    %178 = tpu.iota {dimensions = array<i32: 1>} : vector<8x128xi32>
    %c0_i32_45 = arith.constant 0 : i32
    %179 = vector.broadcast %c0_i32_45 : i32 to vector<8x128xi32>
    %180 = arith.cmpi eq, %178, %179 : vector<8x128xi32>
    %cst_46 = arith.constant 0.000000e+00 : f32
    %181 = vector.broadcast %57 : f32 to vector<8x128xf32>
    %182 = vector.broadcast %cst_46 : f32 to vector<8x128xf32>
    %183 = arith.select %180, %181, %182 : vector<8x128xi1>, vector<8x128xf32>
    %c1_i32 = arith.constant 1 : i32
    %184 = vector.broadcast %c1_i32 : i32 to vector<8x128xi32>
    %185 = arith.cmpi eq, %178, %184 : vector<8x128xi32>
    %cst_47 = arith.constant 0.000000e+00 : f32
    %186 = vector.broadcast %72 : f32 to vector<8x128xf32>
    %187 = vector.broadcast %cst_47 : f32 to vector<8x128xf32>
    %188 = arith.select %185, %186, %187 : vector<8x128xi1>, vector<8x128xf32>
    %189 = arith.addf %183, %188 : vector<8x128xf32>
    %c2_i32 = arith.constant 2 : i32
    %190 = vector.broadcast %c2_i32 : i32 to vector<8x128xi32>
    %191 = arith.cmpi eq, %178, %190 : vector<8x128xi32>
    %cst_48 = arith.constant 0.000000e+00 : f32
    %192 = vector.broadcast %82 : f32 to vector<8x128xf32>
    %193 = vector.broadcast %cst_48 : f32 to vector<8x128xf32>
    %194 = arith.select %191, %192, %193 : vector<8x128xi1>, vector<8x128xf32>
    %195 = arith.addf %189, %194 : vector<8x128xf32>
    %c3_i32_49 = arith.constant 3 : i32
    %196 = vector.broadcast %c3_i32_49 : i32 to vector<8x128xi32>
    %197 = arith.cmpi eq, %178, %196 : vector<8x128xi32>
    %198 = arith.mulf %100, %1 : f32
    %cst_50 = arith.constant 0.000000e+00 : f32
    %199 = vector.broadcast %198 : f32 to vector<8x128xf32>
    %200 = vector.broadcast %cst_50 : f32 to vector<8x128xf32>
    %201 = arith.select %197, %199, %200 : vector<8x128xi1>, vector<8x128xf32>
    %202 = arith.addf %195, %201 : vector<8x128xf32>
    %c4_i32_51 = arith.constant 4 : i32
    %203 = vector.broadcast %c4_i32_51 : i32 to vector<8x128xi32>
    %204 = arith.cmpi eq, %178, %203 : vector<8x128xi32>
    %205 = arith.mulf %177, %1 : f32
    %cst_52 = arith.constant 0.000000e+00 : f32
    %206 = vector.broadcast %205 : f32 to vector<8x128xf32>
    %207 = vector.broadcast %cst_52 : f32 to vector<8x128xf32>
    %208 = arith.select %204, %206, %207 : vector<8x128xi1>, vector<8x128xf32>
    %209 = arith.addf %202, %208 : vector<8x128xf32>
    %210 = vector.shape_cast %209 : vector<8x128xf32> to vector<1x1x8x128xf32>
    %c0_53 = arith.constant 0 : index
    %c0_54 = arith.constant 0 : index
    %c0_55 = arith.constant 0 : index
    %c0_56 = arith.constant 0 : index
    %211 = vector.load %arg6[%c0_53, %c0_54, %c0_55, %c0_56] : memref<1x1x8x128xf32, #tpu.memory_space<vmem>>, vector<1x1x8x128xf32>
    tpu.vector_store %arg6[%c0_53, %c0_54, %c0_55, %c0_56], %210 {strides = array<i32>} : memref<1x1x8x128xf32, #tpu.memory_space<vmem>>, vector<1x1x8x128xf32>,
    return
  }
  func.func @transform_0(%arg0: i32, %arg1: i32) -> (i32, i32) {
    %c1_i32 = arith.constant 1 : i32
    %0 = arith.muli %arg0, %c1_i32 : i32
    %1 = arith.addi %0, %arg1 : i32
    %c0_i32 = arith.constant 0 : i32
    %c0_i32_0 = arith.constant 0 : i32
    return %1, %c0_i32 : i32, i32
  }
  func.func @transform_1(%arg0: i32, %arg1: i32) -> (i32, i32, i32) {
    %c0_i32 = arith.constant 0 : i32
    %c0_i32_0 = arith.constant 0 : i32
    %c0_i32_1 = arith.constant 0 : i32
    return %arg0, %c0_i32, %c0_i32_0 : i32, i32, i32
  }
  func.func @transform_2(%arg0: i32, %arg1: i32) -> (i32, i32, i32) {
    %c0_i32 = arith.constant 0 : i32
    %c0_i32_0 = arith.constant 0 : i32
    %c0_i32_1 = arith.constant 0 : i32
    return %arg0, %c0_i32, %c0_i32_0 : i32, i32, i32
  }
  func.func @transform_3(%arg0: i32, %arg1: i32) -> (i32, i32, i32) {
    %c0_i32 = arith.constant 0 : i32
    %c0_i32_0 = arith.constant 0 : i32
    %c0_i32_1 = arith.constant 0 : i32
    return %arg0, %c0_i32, %c0_i32_0 : i32, i32, i32
  }
  func.func @transform_4(%arg0: i32, %arg1: i32) -> (i32, i32, i32, i32) {
    %c0_i32 = arith.constant 0 : i32
    %c0_i32_0 = arith.constant 0 : i32
    %c0_i32_1 = arith.constant 0 : i32
    return %arg0, %arg1, %c0_i32, %c0_i32_0 : i32, i32, i32, i32
  }
}

</mosaic_0001>

<llo_original>
// kernel: tpu_custom_call.1
$region0: #{tpu_custom_call.1}
  #allocation0 [shape = 'u32[]', space=smem, size = 0x4, offset = 0x4, fixed_abs, tag = 'smem constant byte address 0x4 - core index']
  #allocation1 [shape = 'u32[72,128]{1,0:T(1,128)}', space=vmem, size = 0x9000, scoped, tag = 'internal scratch']
  %s0 = inlined_call_operand.vmem [shape: f32[16,5], index: 0, kind: input, shape index: {}]
  %s1 = inlined_call_operand.vmem [shape: f32[2,8,5], index: 1, kind: input, shape index: {}]
  %s2 = inlined_call_operand.vmem [shape: f32[2,8,128], index: 2, kind: input, shape index: {}]
  %s3 = inlined_call_operand.vmem [shape: f32[2,8,128], index: 3, kind: input, shape index: {}]
  %s4 = inlined_call_operand.hbm [shape: f32[2,1,8,128], index: 4, kind: output, shape index: {}]
  %s5 = sld [smem:[#allocation0]]
  $region49: #{tpu_custom_call.1} parent=0
    _
  %s7 = ssub.s32 1, %s5
  %s8 = scalar_select 0, %s7, %s5
  $region1: #{tpu_custom_call.1} parent=0
    #allocation2 [shape = 'u8[8192]{0}', space=vmem, size = 0x2000, scoped, tag = 'output window, operand 0']
    #allocation3 [shape = 's32[2]{0}', space=sflag, size = 0x8, scoped, tag = 'scoped memory for tpu_custom_call.1']
    %9 = vsyncpa [#allocation3], 0
    %s10 = scalar_lea.sflag [#allocation3], 1
    %11 = vsyncpa %s10, 0
    loop: start=0, step=1, limit=4
    $region2: #{tpu_custom_call.1} parent=1 // loop_pre_header
      _
    $region3: #{tpu_custom_call.1} parent=1 // loop_header
      %s13 = sphi 0, %s17
      %p14 = scmp.ge.s32.totalorder %s13, 4
      %s20 = sphi 0, %s32
      %s21 = sphi 0, %s28
      %s22 = sphi 0, %s20
      %s23 = sphi 0, %s21
      %s24 = sphi 0, %s22
      %s25 = sphi 0, %s23
      %s37 = sphi 0, %s39
      %s40 = sphi 0, %s37
      %s41 = sphi 0, %s40
      %s57 = sphi 0, %s41
      %s63 = sphi 0, %s65
      %s66 = sphi 0, %s63
      %s67 = sphi 0, %s66
      %s83 = sphi 0, %s67
      %s89 = sphi 0, %s91
      %s92 = sphi 0, %s89
      %s93 = sphi 0, %s92
      %s109 = sphi 0, %s93
      %s115 = sphi 0, %s117
      %s118 = sphi 0, %s115
      %s119 = sphi 0, %s118
      %s135 = sphi 0, %s119
      %s143 = sphi 0, %s145
      %s146 = sphi 0, %s143
      %s147 = sphi 0, %s146
      %s163 = sphi 0, %s147
    $region4: #{tpu_custom_call.1} parent=1 // loop_header_branch
      %16 = sbr.rel (%p14) target = $region8
    $region5: #{tpu_custom_call.1} parent=1 // loop_body
      %s18 = ssub.s32 %s13, 1
      %s19 = ssub.s32 %s13, 2
      %s26 = sadd.s32 1, %s21
      %p27 = scmp.ge.s32.totalorder %s26, 1
      %s28 = scalar_select %p27, 0, %s26
      %s29 = sadd.s32 1, %s20
      %s30 = scalar_select %p27, %s29, %s20
      %p31 = scmp.ge.s32.totalorder %s30, 2
      %s32 = scalar_select %p31, 0, %s30
      %s33 = sadd.s32 %s20, %s21
      %s34 = sadd.s32 %s32, %s28
      %s35 = ssub.s32 %s33, %s34
      %p36 = scmp.eq.s32.totalorder %s35, 0
      %s38 = sadd.s32 %s37, 1
      %s39 = scalar_select %p36, %s37, %s38
      %p42 = pneg %p36
      %p43 = scmp.eq.s32.totalorder %s13, 1
      %p44 = por %p42, %p43
      %p45 = scmp.ne.s32.totalorder %s37, %s40
      %p46 = scmp.eq.s32.totalorder %s13, 0
      %p47 = por %p45, %p46
      %p48 = scmp.ne.s32.totalorder %s37, %s40
      %p49 = scmp.eq.s32.totalorder %s18, 1
      %p50 = por %p48, %p49
      %p51 = scmp.ne.s32.totalorder %s40, %s41
      %p52 = scmp.eq.s32.totalorder %s18, 0
      %p53 = por %p51, %p52
      %p54 = scmp.ne.s32.totalorder %s40, %s41
      %p55 = scmp.eq.s32.totalorder %s19, 1
      %p56 = por %p54, %p55
      %p58 = scmp.ne.s32.totalorder %s41, %s57
      %p59 = scmp.eq.s32.totalorder %s19, 0
      %p60 = por %p58, %p59
      %s61 = ssub.s32 %s20, %s32
      %p62 = scmp.eq.s32.totalorder %s61, 0
      %s64 = sadd.s32 %s63, 1
      %s65 = scalar_select %p62, %s63, %s64
      %p68 = pneg %p62
      %p69 = scmp.eq.s32.totalorder %s13, 1
      %p70 = por %p68, %p69
      %p71 = scmp.ne.s32.totalorder %s63, %s66
      %p72 = scmp.eq.s32.totalorder %s13, 0
      %p73 = por %p71, %p72
      %p74 = scmp.ne.s32.totalorder %s63, %s66
      %p75 = scmp.eq.s32.totalorder %s18, 1
      %p76 = por %p74, %p75
      %p77 = scmp.ne.s32.totalorder %s66, %s67
      %p78 = scmp.eq.s32.totalorder %s18, 0
      %p79 = por %p77, %p78
      %p80 = scmp.ne.s32.totalorder %s66, %s67
      %p81 = scmp.eq.s32.totalorder %s19, 1
      %p82 = por %p80, %p81
      %p84 = scmp.ne.s32.totalorder %s67, %s83
      %p85 = scmp.eq.s32.totalorder %s19, 0
      %p86 = por %p84, %p85
      %s87 = ssub.s32 %s20, %s32
      %p88 = scmp.eq.s32.totalorder %s87, 0
      %s90 = sadd.s32 %s89, 1
      %s91 = scalar_select %p88, %s89, %s90
      %p94 = pneg %p88
      %p95 = scmp.eq.s32.totalorder %s13, 1
      %p96 = por %p94, %p95
      %p97 = scmp.ne.s32.totalorder %s89, %s92
      %p98 = scmp.eq.s32.totalorder %s13, 0
      %p99 = por %p97, %p98
      %p100 = scmp.ne.s32.totalorder %s89, %s92
      %p101 = scmp.eq.s32.totalorder %s18, 1
      %p102 = por %p100, %p101
      %p103 = scmp.ne.s32.totalorder %s92, %s93
      %p104 = scmp.eq.s32.totalorder %s18, 0
      %p105 = por %p103, %p104
      %p106 = scmp.ne.s32.totalorder %s92, %s93
      %p107 = scmp.eq.s32.totalorder %s19, 1
      %p108 = por %p106, %p107
      %p110 = scmp.ne.s32.totalorder %s93, %s109
      %p111 = scmp.eq.s32.totalorder %s19, 0
      %p112 = por %p110, %p111
      %s113 = ssub.s32 %s20, %s32
      %p114 = scmp.eq.s32.totalorder %s113, 0
      %s116 = sadd.s32 %s115, 1
      %s117 = scalar_select %p114, %s115, %s116
      %p120 = pneg %p114
      %p121 = scmp.eq.s32.totalorder %s13, 1
      %p122 = por %p120, %p121
      %p123 = scmp.ne.s32.totalorder %s115, %s118
      %p124 = scmp.eq.s32.totalorder %s13, 0
      %p125 = por %p123, %p124
      %p126 = scmp.ne.s32.totalorder %s115, %s118
      %p127 = scmp.eq.s32.totalorder %s18, 1
      %p128 = por %p126, %p127
      %p129 = scmp.ne.s32.totalorder %s118, %s119
      %p130 = scmp.eq.s32.totalorder %s18, 0
      %p131 = por %p129, %p130
      %p132 = scmp.ne.s32.totalorder %s118, %s119
      %p133 = scmp.eq.s32.totalorder %s19, 1
      %p134 = por %p132, %p133
      %p136 = scmp.ne.s32.totalorder %s119, %s135
      %p137 = scmp.eq.s32.totalorder %s19, 0
      %p138 = por %p136, %p137
      %s139 = ssub.s32 %s20, %s32
      %s140 = ssub.s32 %s21, %s28
      %s141 = sor.u32 %s139, %s140
      %p142 = scmp.eq.s32.totalorder %s141, 0
      %s144 = sadd.s32 %s143, 1
      %s145 = scalar_select %p142, %s143, %s144
      %p148 = pneg %p142
      %p149 = scmp.eq.s32.totalorder %s13, 1
      %p150 = por %p148, %p149
      %p151 = scmp.ne.s32.totalorder %s143, %s146
      %p152 = scmp.eq.s32.totalorder %s13, 0
      %p153 = por %p151, %p152
      %p154 = scmp.ne.s32.totalorder %s143, %s146
      %p155 = scmp.eq.s32.totalorder %s18, 1
      %p156 = por %p154, %p155
      %p157 = scmp.ne.s32.totalorder %s146, %s147
      %p158 = scmp.eq.s32.totalorder %s18, 0
      %p159 = por %p157, %p158
      %p160 = scmp.ne.s32.totalorder %s146, %s147
      %p161 = scmp.eq.s32.totalorder %s19, 1
      %p162 = por %p160, %p161
      %p164 = scmp.ne.s32.totalorder %s147, %s163
      %p165 = scmp.eq.s32.totalorder %s19, 0
      %p166 = por %p164, %p165
      %p167 = scmp.le.s32.totalorder 1, %s13
      %p168 = scmp.lt.s32.totalorder %s13, 3
      %p169 = pnand %p167, %p168
      %p170 = pneg %p169
      // Predicated region
      $region9: #{tpu_custom_call.1} parent=5 // pred_check
        _
      $region10: #{tpu_custom_call.1} parent=5 // pred_check_branch
        %172 = sbr.rel (%p169) target = $region12
      $region11: #{tpu_custom_call.1} parent=5 // pred_region
        %s173 = ssub.s32 %s13, 1
      $region12: #{tpu_custom_call.1} parent=5 // pred_fallthru
        _
      %p174 = scmp.lt.s32.totalorder %s13, 2
      // Predicated region
      $region13: #{tpu_custom_call.1} parent=5 // pred_check
        %p175 = pneg %p174
      $region14: #{tpu_custom_call.1} parent=5 // pred_check_branch
        %177 = sbr.rel (%p175) target = $region16
      $region15: #{tpu_custom_call.1} parent=5 // pred_region
        // Predicated region
        $region17: #{tpu_custom_call.1} parent=15 // pred_check
          %p178 = pneg %p47
        $region18: #{tpu_custom_call.1} parent=15 // pred_check_branch
          %180 = sbr.rel (%p178) target = $region20
        $region19: #{tpu_custom_call.1} parent=15 // pred_region
          %s181 = sadd.s32 %s20, %s21
          %p182 = scmp.lt.s32.totalorder %s181, 1
          %s183 = scalar_select %p182, %s181, 1
          %s184 = smul.addr %s183, 8
          %s185 = scalar_lea.vmem %s0, %s184
          %s186 = sadd.s32 %s20, %s21
        $region20: #{tpu_custom_call.1} parent=15 // pred_fallthru
          _
        // Predicated region
        $region21: #{tpu_custom_call.1} parent=15 // pred_check
          %p187 = pneg %p73
        $region22: #{tpu_custom_call.1} parent=15 // pred_check_branch
          %189 = sbr.rel (%p187) target = $region24
        $region23: #{tpu_custom_call.1} parent=15 // pred_region
          %p190 = scmp.lt.s32.totalorder %s20, 1
          %s191 = scalar_select %p190, %s20, 1
          %s192 = smul.addr %s191, 8
          %s193 = scalar_lea.vmem %s1, %s192
        $region24: #{tpu_custom_call.1} parent=15 // pred_fallthru
          _
        // Predicated region
        $region25: #{tpu_custom_call.1} parent=15 // pred_check
          %p194 = pneg %p99
        $region26: #{tpu_custom_call.1} parent=15 // pred_check_branch
          %196 = sbr.rel (%p194) target = $region28
        $region27: #{tpu_custom_call.1} parent=15 // pred_region
          %p197 = scmp.lt.s32.totalorder %s20, 1
          %s198 = scalar_select %p197, %s20, 1
          %s199 = smul.addr %s198, 8
          %s200 = scalar_lea.vmem %s2, %s199
        $region28: #{tpu_custom_call.1} parent=15 // pred_fallthru
          _
        // Predicated region
        $region29: #{tpu_custom_call.1} parent=15 // pred_check
          %p201 = pneg %p125
        $region30: #{tpu_custom_call.1} parent=15 // pred_check_branch
          %203 = sbr.rel (%p201) target = $region32
        $region31: #{tpu_custom_call.1} parent=15 // pred_region
          %p204 = scmp.lt.s32.totalorder %s20, 1
          %s205 = scalar_select %p204, %s20, 1
          %s206 = smul.addr %s205, 8
          %s207 = scalar_lea.vmem %s3, %s206
        $region32: #{tpu_custom_call.1} parent=15 // pred_fallthru
          _
      $region16: #{tpu_custom_call.1} parent=5 // pred_fallthru
        _
      %p208 = scmp.le.s32.totalorder 1, %s13
      %p209 = scmp.lt.s32.totalorder %s13, 3
      %p210 = pnand %p208, %p209
      %p211 = pneg %p210
      // Predicated region
      $region33: #{tpu_custom_call.1} parent=5 // pred_check
        _
      $region34: #{tpu_custom_call.1} parent=5 // pred_check_branch
        %213 = sbr.rel (%p210) target = $region36
      $region35: #{tpu_custom_call.1} parent=5 // pred_region
        %s214 = ssub.s32 %s13, 1
        %s215 = sadd.s32 %s22, %s23
        %p216 = scmp.lt.s32.totalorder %s215, 1
        %s217 = scalar_select %p216, %s215, 1
        %s218 = smul.addr %s217, 8
        %s219 = scalar_lea.vmem %s0, %s218
        %p220 = pneg %p53
        %p221 = pneg %p50
        %p222 = scmp.lt.s32.totalorder %s22, 1
        %s223 = scalar_select %p222, %s22, 1
        %s224 = smul.addr %s223, 8
        %s225 = scalar_lea.vmem %s1, %s224
        %p226 = pneg %p79
        %p227 = pneg %p76
        %p228 = scmp.lt.s32.totalorder %s22, 1
        %s229 = scalar_select %p228, %s22, 1
        %s230 = smul.addr %s229, 8
        %s231 = scalar_lea.vmem %s2, %s230
        %p232 = pneg %p105
        %p233 = pneg %p102
        %p234 = scmp.lt.s32.totalorder %s22, 1
        %s235 = scalar_select %p234, %s22, 1
        %s236 = smul.addr %s235, 8
        %s237 = scalar_lea.vmem %s3, %s236
        %p238 = pneg %p131
        %p239 = pneg %p128
        %p240 = pneg %p159
        %p241 = pneg %p156
        %s242 = sand.u32 %s146, 1
        %s243 = scalar_lea.sflag [#allocation3], %s242
        %s244 = sand.u32 %s146, 1
        %s245 = smul.addr %s244, 8
        %s246 = scalar_lea.vmem [#allocation2], %s245
        %s247 = sadd.s32 %s22, %s23
        %p248 = scmp.lt.s32.totalorder %s247, 1
        %s249 = scalar_select %p248, %s247, 1
        %s250 = smul.addr %s249, 8
        %s251 = scalar_lea.vmem %s0, %s250
        %s252 = sadd.s32 %s22, %s23
        %p253 = scmp.lt.s32.totalorder %s22, 1
        %s254 = scalar_select %p253, %s22, 1
        %s255 = smul.addr %s254, 8
        %s256 = scalar_lea.vmem %s1, %s255
        %p257 = scmp.lt.s32.totalorder %s22, 1
        %s258 = scalar_select %p257, %s22, 1
        %s259 = smul.addr %s258, 8
        %s260 = scalar_lea.vmem %s2, %s259
        %p261 = scmp.lt.s32.totalorder %s22, 1
        %s262 = scalar_select %p261, %s22, 1
        %s263 = smul.addr %s262, 8
        %s264 = scalar_lea.vmem %s3, %s263
        %p265 = scmp.eq.s32.totalorder %s23, 0
        %s266 = scalar_select %p265, 1.0, 0.0
        %v267 = vld [vmem:[%s251] sm:$0xff]
        %v268 = vlaneseq
        %v269 = vshrl.u32 %v268, 7
        %s270 = smul.u32 %s23, 8
        %v271 = vstv %s270
        %v272 = vadd.s32 %v271, %v269
        %vm273 = vcmp.lt.s32.totalorder %v272, 8
        %v274 = vsel %vm273, 1, 0
        %v275 = vcvt.s32.f32 %v274
        %vm276 = vcmp.ge.s32.totalorder %v272, 3
        %vm277 = vmand %vm276, %vm273
        %v278 = vsel %vm277, 1, 0
        %v279 = vcvt.s32.f32 %v278
        %v280 = vlaneseq
        %v281 = vand.u32 %v280, 127
        %vm282 = vcmask 39936
        %v283 = vsel %vm282, %v267, -inf
        %284 = vmax.xlane.f32.xlu0 %v283
        %v285 = vpop.xlane.xlu0 %284
        %v286 = vsub.f32 %v267, %v285
        %v287 = vmul.f32 %v286, 1.442695
        %v288 = vpow.pop %v287
        %v289 = vsel %vm282, %v288, 0.0
        %290 = vadd.xlane.f32.xlu0 %v289
        %v291 = vpop.xlane.xlu0 %290
        %v292 = vlog2.pop %v291
        %v293 = vmul.f32 %v292, 0.6931472
        %v294 = vadd.f32 %v285, %v293
        %vm295 = vcmp.eq.s32.totalorder %v281, 4
        %v296 = vsel %vm295, %v267, 0.0
        %v297 = vsel %vm282, %v296, 0.0
        %298 = vadd.xlane.f32.xlu0 %v297
        %v299 = vpop.xlane.xlu0 %298
        %v300 = vsub.f32 %v294, %v299
        %v301 = vmul.f32 %v279, %v300
        %vm302 = vcmask 7168
        %v303 = vsel %vm302, %v301, 0.0
        %304 = vadd.xlane.f32.xlu0 %v303
        %v305 = vpop.xlane.xlu0 %304
        %v306 = vrot.slane %v305, 4
        %v307 = vadd.f32 %v305, %v306
        %v308 = vrot.slane %v307, 2
        %v309 = vadd.f32 %v307, %v308
        %v310 = vrot.slane %v309, 1
        %v311 = vadd.f32 %v309, %v310
        %s312 = vtos %v311
        %s313 = smul.f32 %s312, 0.1
        %v314 = vld [vmem:[%s256] sm:$0xff]
        %v315 = vsel %vm282, %v314, 0.0
        %316 = vadd.xlane.f32.xlu0 %v315
        %v317 = vpop.xlane.xlu0 %316
        %v318 = vmul.f32 %v294, %v317
        %v319 = vsel %vm302, %v318, 0.0
        %320 = vadd.xlane.f32.xlu0 %v319
        %v321 = vpop.xlane.xlu0 %320
        %v322 = vrot.slane %v321, 4
        %v323 = vadd.f32 %v321, %v322
        %v324 = vrot.slane %v323, 2
        %v325 = vadd.f32 %v323, %v324
        %v326 = vrot.slane %v325, 1
        %v327 = vadd.f32 %v325, %v326
        %s328 = vtos %v327
        %v329 = vmul.f32 %v267, %v314
        %v330 = vsel %vm282, %v329, 0.0
        %331 = vadd.xlane.f32.xlu0 %v330
        %v332 = vpop.xlane.xlu0 %331
        %v333 = vrot.slane %v332, 4
        %v334 = vadd.f32 %v332, %v333
        %v335 = vrot.slane %v334, 2
        %v336 = vadd.f32 %v334, %v335
        %v337 = vrot.slane %v336, 1
        %v338 = vadd.f32 %v336, %v337
        %s339 = vtos %v338
        %s340 = ssub.f32 %s328, %s339
        %s341 = smul.f32 %s340, %s266
        %s342 = sadd.f32 %s341, %s313
        %vm343 = vcmp.eq.f32.partialorder %v267, %v285
        %v344 = vsel %vm343, %v281, 5
        %v345 = vsel %vm282, %v344, 2147483647
        %v346 = vand.u32 %v345, 65535
        %v347 = vshra.s32 %v345, 16
        %v348 = vcvt.s32.f32 %v346
        %v349 = vcvt.s32.f32 %v347
        %350 = vmin.xlane.f32.xlu0 %v349
        %v351 = vpop.xlane.xlu0 %350
        %vm352 = vcmp.eq.f32.partialorder %v349, %v351
        %v353 = vsel %vm352, %v348, inf
        %354 = vmin.xlane.f32.xlu0 %v353
        %v355 = vpop.xlane.xlu0 %354
        %v356 = vcvt.f32.s32 %v355
        %v357 = vcvt.f32.s32 %v351
        %v358 = vshll.u32 %v357, 16
        %v359 = vadd.s32 %v358, %v356
        %vm360 = vcmp.ne.s32.totalorder %v359, 4
        %v361 = vsel %vm360, 1, 0
        %v362 = vcvt.s32.f32 %v361
        %v363 = vmul.f32 %v362, %v275
        %v364 = vsel %vm302, %v363, 0.0
        %365 = vadd.xlane.f32.xlu0 %v364
        %v366 = vpop.xlane.xlu0 %365
        %v367 = vrot.slane %v366, 4
        %v368 = vadd.f32 %v366, %v367
        %v369 = vrot.slane %v368, 2
        %v370 = vadd.f32 %v368, %v369
        %v371 = vrot.slane %v370, 1
        %v372 = vadd.f32 %v370, %v371
        %s373 = vtos %v372
        %vm374 = vcmp.eq.s32.totalorder %v281, %v359
        %v375 = vsel %vm374, 1, 0
        %v376 = vcvt.s32.f32 %v375
        %v377 = vmul.f32 %v314, %v376
        %v378 = vsel %vm282, %v377, 0.0
        %379 = vadd.xlane.f32.xlu0 %v378
        %v380 = vpop.xlane.xlu0 %379
        %v381 = vrot.slane %v380, 4
        %v382 = vadd.f32 %v380, %v381
        %v383 = vrot.slane %v382, 2
        %v384 = vadd.f32 %v382, %v383
        %v385 = vrot.slane %v384, 1
        %v386 = vadd.f32 %v384, %v385
        %s387 = vtos %v386
        %s388 = smul.f32 %s266, %s387
        %v389 = vld [vmem:[%s260] sm:$0xff]
        %v390 = vld [vmem:[%s264] sm:$0xff]
        %vm391 = vcmp.lt.s32.totalorder %v281, 3
        %v392 = vsel %vm391, 1, 0
        %v393 = vcvt.s32.f32 %v392
        %v394 = vsub.f32 %v389, %v390
        %v395 = vand.u32 2147483647, %v394
        %v396 = vrot.slane %v395, 4
        %v397 = vadd.f32 %v395, %v396
        %v398 = vrot.slane %v397, 2
        %v399 = vadd.f32 %v397, %v398
        %v400 = vrot.slane %v399, 1
        %v401 = vadd.f32 %v399, %v400
        %v402 = vmul.f32 %v401, %v393
        %vm403 = vcmask 1040384
        %v404 = vsel %vm403, %v402, 0.0
        %405 = vadd.xlane.f32.xlu0 %v404
        %v406 = vpop.xlane.xlu0 %405
        %v407 = vrot.slane %v406, 4
        %v408 = vadd.f32 %v406, %v407
        %v409 = vrot.slane %v408, 2
        %v410 = vadd.f32 %v408, %v409
        %v411 = vrot.slane %v410, 1
        %v412 = vadd.f32 %v410, %v411
        %s413 = vtos %v412
        %v414 = vmul.f32 %v389, 0.5
        %v416 = vrot.slane %v414, 2
        %v418 = vsub.f32 %v389, %v416
        %v419 = vadd.f32 %v389, %v416
        %v420 = vmul.f32 %v390, 0.5
        %v422 = vrot.slane %v420, 2
        %v424 = vsub.f32 %v390, %v422
        %v425 = vadd.f32 %v390, %v422
        %v426 = vsub.f32 %v419, %v418
        %v428 = vrot.slane %v426, 1
        %v430 = vmul.f32 %v426, %v428
        %v431 = vsub.f32 %v425, %v424
        %v433 = vrot.slane %v431, 1
        %v435 = vmul.f32 %v431, %v433
        %v436 = vmin.f32 %v419, %v425
        %v437 = vmax.f32 %v418, %v424
        %v438 = vsub.f32 %v436, %v437
        %v439 = vmax.f32 %v438, 0.0
        %v441 = vrot.slane %v439, 1
        %v443 = vmul.f32 %v439, %v441
        %v444 = vadd.f32 %v430, %v435
        %v445 = vsub.f32 %v444, %v443
        %v446 = vmax.f32 %v445, 1e-07
        %v447 = vrcp.pop %v446
        %v448 = vmul.f32 %v446, %v447
        %v449 = vsub.f32 1.0, %v448
        %v450 = vmul.f32 %v447, %v449
        %v451 = vadd.f32 %v447, %v450
        %vm452 = vweird.f32 %v446
        %vm453 = vweird.f32 %v447
        %vm454 = vmor %vm452, %vm453
        %v455 = vsel %vm454, %v447, %v451
        %v456 = vand.u32 2147483647, %v446
        %vm457 = vcmp.eq.f32.partialorder %v456, 8.507059e+37
        %v458 = vand.u32 %v446, 2147483648
        %v459 = vor.u32 1.1754944e-38, %v458
        %v460 = vsel %vm457, %v459, %v455
        %v461 = vmul.f32 %v443, %v460
        %v462 = vmax.f32 %v419, %v425
        %v463 = vmin.f32 %v418, %v424
        %v464 = vsub.f32 %v462, %v463
        %v465 = vmax.f32 %v464, 0.0
        %v467 = vrot.slane %v465, 1
        %v469 = vmul.f32 %v465, %v467
        %v470 = vmax.f32 %v469, 1e-07
        %v471 = vsub.f32 %v470, %v445
        %v472 = vrcp.pop %v470
        %v473 = vmul.f32 %v470, %v472
        %v474 = vsub.f32 1.0, %v473
        %v475 = vmul.f32 %v472, %v474
        %v476 = vadd.f32 %v472, %v475
        %vm477 = vweird.f32 %v470
        %vm478 = vweird.f32 %v472
        %vm479 = vmor %vm477, %vm478
        %v480 = vsel %vm479, %v472, %v476
        %v481 = vand.u32 2147483647, %v470
        %vm482 = vcmp.eq.f32.partialorder %v481, 8.507059e+37
        %v483 = vand.u32 %v470, 2147483648
        %v484 = vor.u32 1.1754944e-38, %v483
        %v485 = vsel %vm482, %v484, %v480
        %v486 = vmul.f32 %v471, %v485
        %v487 = vsub.f32 %v461, %v486
        %v488 = vsub.f32 1.0, %v487
        %v489 = vmul.f32 %v488, %v393
        %v490 = vsel %vm403, %v489, 0.0
        %491 = vadd.xlane.f32.xlu0 %v490
        %v492 = vpop.xlane.xlu0 %491
        %v493 = vrot.slane %v492, 4
        %v494 = vadd.f32 %v492, %v493
        %v495 = vrot.slane %v494, 2
        %v496 = vadd.f32 %v494, %v495
        %v497 = vrot.slane %v496, 1
        %v498 = vadd.f32 %v496, %v497
        %s499 = vtos %v498
        %vm500 = vcmp.eq.s32.totalorder %v281, 0
        %v501 = vstv %s342
        %v502 = vsel %vm500, %v501, 0.0
        %vm503 = vcmp.eq.s32.totalorder %v281, 1
        %v504 = vstv %s373
        %v505 = vsel %vm503, %v504, 0.0
        %v506 = vadd.f32 %v502, %v505
        %vm507 = vcmp.eq.s32.totalorder %v281, 2
        %v508 = vstv %s388
        %v509 = vsel %vm507, %v508, 0.0
        %v510 = vadd.f32 %v506, %v509
        %vm511 = vcmp.eq.s32.totalorder %v281, 3
        %s512 = smul.f32 %s413, %s266
        %v513 = vstv %s512
        %v514 = vsel %vm511, %v513, 0.0
        %v515 = vadd.f32 %v510, %v514
        %s516 = smul.f32 %s499, %s266
        %v517 = vstv %s516
        %v518 = vsel %vm295, %v517, 0.0
        %v519 = vadd.f32 %v515, %v518
        %520 = vst [vmem:[%s246] sm:$0xff] %v519
        %s521 = sand.u32 %s146, 1
        %s522 = scalar_lea.sflag [#allocation3], %s521
        %s523 = sand.u32 %s146, 1
        %s524 = smul.addr %s523, 8
        %s525 = scalar_lea.vmem [#allocation2], %s524
        // Predicated region
        $region37: #{tpu_custom_call.1} parent=35 // pred_check
          %p526 = pneg %p156
        $region38: #{tpu_custom_call.1} parent=35 // pred_check_branch
          %528 = sbr.rel (%p526) target = $region40
        $region39: #{tpu_custom_call.1} parent=35 // pred_region
          %530 = vsyncadd %s522, 0
          %s531 = sadd.s32 %s23, %s22
          %s532 = smul.addr %s531, 8
          %s533 = scalar_lea.hbm %s4, %s532
          %s535 = sshll.u32 %s525, 4
          %s536 = int_to_ptr.vmem [resolvable:$true] %s535
          %s537 = sshll.u32 %s533, 4
          %s538 = int_to_ptr.hbm [resolvable:$true] %s537
          %540 = dma.vmem_to_hbm [thread:$0]  %s536, 128, %s538, %s522
        $region40: #{tpu_custom_call.1} parent=35 // pred_fallthru
          _
      $region36: #{tpu_custom_call.1} parent=5 // pred_fallthru
        _
      %p541 = scmp.le.s32.totalorder 2, %s13
      // Predicated region
      $region41: #{tpu_custom_call.1} parent=5 // pred_check
        %p542 = pneg %p541
      $region42: #{tpu_custom_call.1} parent=5 // pred_check_branch
        %544 = sbr.rel (%p542) target = $region44
      $region43: #{tpu_custom_call.1} parent=5 // pred_region
        %s545 = ssub.s32 %s13, 2
        // Predicated region
        $region45: #{tpu_custom_call.1} parent=43 // pred_check
          %p546 = pneg %p162
        $region46: #{tpu_custom_call.1} parent=43 // pred_check_branch
          %548 = sbr.rel (%p546) target = $region48
        $region47: #{tpu_custom_call.1} parent=43 // pred_region
          %s549 = sand.u32 %s147, 1
          %s550 = scalar_lea.sflag [#allocation3], %s549
          %s551 = sand.u32 %s147, 1
          %s552 = smul.addr %s551, 8
          %s553 = scalar_lea.vmem [#allocation2], %s552
          %555 = dma.done %s550, 128
        $region48: #{tpu_custom_call.1} parent=43 // pred_fallthru
          _
      $region44: #{tpu_custom_call.1} parent=5 // pred_fallthru
        _
    $region6: #{tpu_custom_call.1} parent=1 // loop_footer
      %s17 = sadd.s32 1, %s13
    $region7: #{tpu_custom_call.1} parent=1 // loop_footer_branch
      %12 = sbr.rel target = $region3
    $region8: #{tpu_custom_call.1} parent=1 // loop_exit
      _
    %556 = vsyncpa [#allocation3], 1
    %s557 = scalar_lea.sflag [#allocation3], 1
    %558 = vsyncpa %s557, 1

</llo_original>
